<compile_context>
chip_gen: v5e
topology: v5e:2x2
jax: 0.10.0
libtpu: 0.0.40
codegen_flags: <defaults>
</compile_context>

<pallas_src>
import functools

import jax
import jax.numpy as jnp
from jax import lax
from jax.experimental import pallas as pl
from jax.experimental.pallas import tpu as pltpu


def _triplet_loss_kernel(xi_ref, xj_ref, ri_ref, rj_ref, li_ref, lj_ref,
                         o_ref, hp_ref, hn_ref,
                         *, margin, inv_n, n_valid, tile, has_pad):
    i_t = pl.program_id(0)
    j_t = pl.program_id(1)

    # ---- init running accumulators on the first column tile ------------------
    @pl.when(j_t == 0)
    def _():
        hp_ref[...] = jnp.zeros_like(hp_ref)             # distances >= 0, diag excluded
        hn_ref[...] = jnp.full_like(hn_ref, jnp.inf)     # running-min identity

    # ---- Gram tile on the MXU (contract the feature dim of both operands) ----
    g = lax.dot_general(
        xi_ref[...], xj_ref[...],
        dimension_numbers=(((1,), (1,)), ((), ())),
        preferred_element_type=jnp.float32,
    )                                                    # (TILE, TILE) f32

    # Pairwise squared distances, clamped and scaled.  (The reference's diagonal
    # fill is handled by excluding the diagonal from the positive mask.)
    dw = jnp.maximum(ri_ref[...] - 2.0 * g + rj_ref[...], 0.0) * inv_n   # (TILE, TILE)

    # ---- class masks as booleans (no float-mask arithmetic) -------------------
    pos = li_ref[...] == lj_ref[...]                     # (TILE, TILE) bool
    neg = jnp.logical_not(pos)
    if has_pad:
        # Padded columns (global col index >= n_valid) are neither positives nor
        # negatives; (1, TILE) iota + compare, label-value independent.
        col_ids = lax.broadcasted_iota(jnp.int32, (1, tile), 1) + j_t * tile
        col_ok = col_ids < n_valid
        pos = jnp.logical_and(pos, col_ok)
        neg = jnp.logical_and(neg, col_ok)

    # ---- hardest positive (running max); diag mask only on diagonal tiles -----
    @pl.when(i_t == j_t)
    def _():
        rid = lax.broadcasted_iota(jnp.int32, (tile, tile), 0)
        cid = lax.broadcasted_iota(jnp.int32, (tile, tile), 1)
        pos_d = jnp.where(jnp.logical_and(pos, rid != cid), dw, 0.0)
        hp_ref[...] = jnp.maximum(hp_ref[...],
                                  jnp.max(pos_d, axis=1, keepdims=True))

    @pl.when(i_t != j_t)
    def _():
        pos_d = jnp.where(pos, dw, 0.0)
        hp_ref[...] = jnp.maximum(hp_ref[...],
                                  jnp.max(pos_d, axis=1, keepdims=True))

    # ---- hardest negative (running min, +inf identity) ------------------------
    neg_d = jnp.where(neg, dw, jnp.inf)
    hn_ref[...] = jnp.minimum(hn_ref[...],
                              jnp.min(neg_d, axis=1, keepdims=True))

    # ---- finalize per-row loss on the last column tile (single store) ---------
    @pl.when(j_t == pl.num_programs(1) - 1)
    def _():
        o_ref[...] = jnp.maximum(hp_ref[...] - hn_ref[...] + margin, 0.0)


def triplet_loss(embeddings, labels, margin=1.0, *, tile=512,
                 use_bf16_matmul=False):
    """Pallas TPU implementation of TripletLoss.forward(embeddings, labels)."""
    n, p = embeddings.shape

    p_pad = pl.cdiv(p, 128) * 128            # lane-dense feature dim

    # Tile choice: multiple of 128, no larger than the padded N, and small
    # enough that the double-buffered row/col x tiles stay well inside VMEM
    # (safe on v7x's 64 MiB as well as v5e/v6e's 128 MiB).
    tile = max(128, (int(tile) // 128) * 128)
    tile = min(tile, pl.cdiv(n, 128) * 128)
    x_bytes = 2 if use_bf16_matmul else 4
    vmem_budget = 40 * 1024 * 1024
    while tile > 128 and 4 * tile * p_pad * x_bytes > vmem_budget:
        tile -= 128
    n_pad = pl.cdiv(n, tile) * tile

    x32 = embeddings.astype(jnp.float32)
    x_pad = jnp.pad(x32, ((0, n_pad - n), (0, p_pad - p)))

    # Squared norms computed once (O(N*P)); fed as column and row vectors so the
    # kernel never extracts diag(G) or transposes anything.
    r = jnp.sum(x_pad * x_pad, axis=1)
    r_col = r.reshape(n_pad, 1)
    r_row = r.reshape(1, n_pad)

    lab = labels.astype(jnp.int32).reshape(n)
    lab_pad = jnp.pad(lab, (0, n_pad - n), constant_values=-1)
    lab_col = lab_pad.reshape(n_pad, 1)
    lab_row = lab_pad.reshape(1, n_pad)

    # bf16 Gram matmul (f32 accumulation) halves DMA traffic and uses the fast
    # MXU path on v6e/v7x; element-wise math stays f32 inside the kernel.
    x_in = x_pad.astype(jnp.bfloat16) if use_bf16_matmul else x_pad

    kernel = functools.partial(
        _triplet_loss_kernel,
        margin=float(margin),
        inv_n=1.0 / float(n),
        n_valid=int(n),
        tile=int(tile),
        has_pad=(n_pad != n),
    )

    per_row_loss = pl.pallas_call(
        kernel,
        grid=(n_pad // tile, n_pad // tile),
        in_specs=[
            pl.BlockSpec((tile, p_pad), lambda i, j: (i, 0)),   # x row tile (resident over j)
            pl.BlockSpec((tile, p_pad), lambda i, j: (j, 0)),   # x col tile
            pl.BlockSpec((tile, 1),     lambda i, j: (i, 0)),   # r_i (column)
            pl.BlockSpec((1, tile),     lambda i, j: (0, j)),   # r_j (row)
            pl.BlockSpec((tile, 1),     lambda i, j: (i, 0)),   # labels_i
            pl.BlockSpec((1, tile),     lambda i, j: (0, j)),   # labels_j
        ],
        out_specs=pl.BlockSpec((tile, 1), lambda i, j: (i, 0)),
        out_shape=jax.ShapeDtypeStruct((n_pad, 1), jnp.float32),
        scratch_shapes=[
            pltpu.VMEM((tile, 1), jnp.float32),   # running hardest-positive max
            pltpu.VMEM((tile, 1), jnp.float32),   # running hardest-negative min
        ],
        compiler_params=pltpu.CompilerParams(
            dimension_semantics=("parallel", "arbitrary"),
            vmem_limit_bytes=48 * 1024 * 1024,    # above defaults, within v7x 64 MiB
        ),
    )(x_in, x_in, r_col, r_row, lab_col, lab_row)

    # Drop padded rows and take the mean over the true n samples.
    return jnp.sum(per_row_loss[:n, 0]) / jnp.float32(n)


def _reference_triplet_loss(embeddings, labels, margin=1.0):
    """Pure-JAX reference mirroring the PyTorch module."""
    x = embeddings.astype(jnp.float32)
    n = x.shape[0]
    r = jnp.sum(x ** 2, axis=1, keepdims=True)
    S = r - 2.0 * (x @ x.T) + r.T
    S = S * (1.0 - jnp.eye(n, dtype=jnp.float32))   # fill_diagonal_(0)
    S = jnp.maximum(S, 0.0)                         # clamp(min=0)
    Dw = S / n
    lab = labels.reshape(n, 1)
    pos = (lab == lab.T).astype(jnp.float32)
    neg = 1.0 - pos
    hp = jnp.max(Dw * pos, axis=1)
    hn = jnp.min(Dw * neg + 1e6 * (1.0 - neg), axis=1)
    return jnp.mean(jnp.maximum(hp - hn + margin, 0.0))


if __name__ == "__main__":
    key = jax.random.PRNGKey(0)
    k1, k2 = jax.random.split(key)

    n_samples, n_features = 8, 32
    embeddings = jax.random.normal(k1, (n_samples, n_features), dtype=jnp.float32)
    labels = jax.random.randint(k2, (n_samples,), 0, 3, dtype=jnp.int32)

    ref = _reference_triplet_loss(embeddings, labels, margin=1.0)

    # f32 path: must match the reference tightly.
    loss = jax.block_until_ready(triplet_loss(embeddings, labels, margin=1.0))
    assert jnp.allclose(loss, ref, atol=1e-5, rtol=1e-5), (loss, ref)

    # bf16-MXU fast path (f32 accumulation): looser tolerance.
    loss_bf16 = jax.block_until_ready(
        triplet_loss(embeddings, labels, margin=1.0, use_bf16_matmul=True))
    assert jnp.allclose(loss_bf16, ref, atol=1e-1, rtol=1e-1), (loss_bf16, ref)

    print("KERNEL_OK")
</pallas_src>

<mosaic_0001>
module attributes {stable_mosaic.version = 11 : i64} {
  func.func @_triplet_loss_kernel(%arg0: i32, %arg1: i32, %arg2: memref<128x128xf32, #tpu.memory_space<vmem>>, %arg3: memref<128x128xf32, #tpu.memory_space<vmem>>, %arg4: memref<128x1xf32, #tpu.memory_space<vmem>>, %arg5: memref<1x128xf32, #tpu.memory_space<vmem>>, %arg6: memref<128x1xi32, #tpu.memory_space<vmem>>, %arg7: memref<1x128xi32, #tpu.memory_space<vmem>>, %arg8: memref<128x1xf32, #tpu.memory_space<vmem>>, %arg9: memref<128x1xf32, #tpu.memory_space<vmem>>, %arg10: memref<128x1xf32, #tpu.memory_space<vmem>>) attributes {dimension_semantics = [#tpu.dimension_semantics<parallel>, #tpu.dimension_semantics<arbitrary>], iteration_bounds = array<i64: 1, 1>, scalar_prefetch = 0 : i64, scratch_operands = 2 : i64, tpu.core_type = #tpu.core_type<tc>, window_params = [{transform_indices = @transform_0, window_bounds = array<i64: 128, 128>}, {transform_indices = @transform_1, window_bounds = array<i64: 128, 128>}, {transform_indices = @transform_2, window_bounds = array<i64: 128, 1>}, {transform_indices = @transform_3, window_bounds = array<i64: 1, 128>}, {transform_indices = @transform_4, window_bounds = array<i64: 128, 1>}, {transform_indices = @transform_5, window_bounds = array<i64: 1, 128>}, {transform_indices = @transform_6, window_bounds = array<i64: 128, 1>}]} {
    %c0_i32 = arith.constant 0 : i32
    %0 = arith.cmpi eq, %arg1, %c0_i32 : i32
    %1 = arith.extui %0 : i1 to i32
    %c0_i32_0 = arith.constant 0 : i32
    %2 = arith.cmpi ne, %1, %c0_i32_0 : i32
    scf.if %2 {
      %cst_26 = arith.constant 0.000000e+00 : f32
      %50 = vector.broadcast %cst_26 : f32 to vector<128x1xf32>
      %c0_27 = arith.constant 0 : index
      %c0_28 = arith.constant 0 : index
      %51 = vector.load %arg9[%c0_27, %c0_28] : memref<128x1xf32, #tpu.memory_space<vmem>>, vector<128x1xf32>
      tpu.vector_store %arg9[%c0_27, %c0_28], %50 {strides = array<i32>} : memref<128x1xf32, #tpu.memory_space<vmem>>, vector<128x1xf32>,
      %cst_29 = arith.constant 0x7F800000 : f32
      %52 = vector.broadcast %cst_29 : f32 to vector<128x1xf32>
      %c0_30 = arith.constant 0 : index
      %c0_31 = arith.constant 0 : index
      %53 = vector.load %arg10[%c0_30, %c0_31] : memref<128x1xf32, #tpu.memory_space<vmem>>, vector<128x1xf32>
      tpu.vector_store %arg10[%c0_30, %c0_31], %52 {strides = array<i32>} : memref<128x1xf32, #tpu.memory_space<vmem>>, vector<128x1xf32>,
    } else {
    }
    %c0 = arith.constant 0 : index
    %c0_1 = arith.constant 0 : index
    %3 = vector.load %arg2[%c0, %c0_1] : memref<128x128xf32, #tpu.memory_space<vmem>>, vector<128x128xf32>
    %c0_2 = arith.constant 0 : index
    %c0_3 = arith.constant 0 : index
    %4 = vector.load %arg3[%c0_2, %c0_3] : memref<128x128xf32, #tpu.memory_space<vmem>>, vector<128x128xf32>
    %cst = arith.constant dense<0.000000e+00> : vector<128x128xf32>
    %5 = tpu.matmul %3, %4, %cst {dimension_numbers = #tpu.dot_dimension_numbers<[1], [1], [0], [0], [0, 0, 1, 0], [], []>} : vector<128x128xf32>, vector<128x128xf32>, vector<128x128xf32> -> vector<128x128xf32>
    %c0_4 = arith.constant 0 : index
    %c0_5 = arith.constant 0 : index
    %6 = vector.load %arg4[%c0_4, %c0_5] : memref<128x1xf32, #tpu.memory_space<vmem>>, vector<128x1xf32>
    %cst_6 = arith.constant 2.000000e+00 : f32
    %7 = vector.broadcast %cst_6 : f32 to vector<128x128xf32>
    %8 = arith.mulf %7, %5 : vector<128x128xf32>
    %9 = vector.broadcast %6 : vector<128x1xf32> to vector<128x128xf32>
    %10 = arith.subf %9, %8 : vector<128x128xf32>
    %c0_7 = arith.constant 0 : index
    %c0_8 = arith.constant 0 : index
    %11 = vector.load %arg5[%c0_7, %c0_8] : memref<1x128xf32, #tpu.memory_space<vmem>>, vector<1x128xf32>
    %12 = vector.broadcast %11 : vector<1x128xf32> to vector<128x128xf32>
    %13 = arith.addf %10, %12 : vector<128x128xf32>
    %cst_9 = arith.constant 0.000000e+00 : f32
    %14 = vector.broadcast %cst_9 : f32 to vector<128x128xf32>
    %15 = arith.maximumf %13, %14 : vector<128x128xf32>
    %cst_10 = arith.constant 1.250000e-01 : f32
    %16 = vector.broadcast %cst_10 : f32 to vector<128x128xf32>
    %17 = arith.mulf %15, %16 : vector<128x128xf32>
    %c0_11 = arith.constant 0 : index
    %c0_12 = arith.constant 0 : index
    %18 = vector.load %arg6[%c0_11, %c0_12] : memref<128x1xi32, #tpu.memory_space<vmem>>, vector<128x1xi32>
    %c0_13 = arith.constant 0 : index
    %c0_14 = arith.constant 0 : index
    %19 = vector.load %arg7[%c0_13, %c0_14] : memref<1x128xi32, #tpu.memory_space<vmem>>, vector<1x128xi32>
    %20 = vector.broadcast %18 : vector<128x1xi32> to vector<128x128xi32>
    %21 = vector.broadcast %19 : vector<1x128xi32> to vector<128x128xi32>
    %22 = arith.cmpi eq, %20, %21 : vector<128x128xi32>
    %cst_15 = arith.constant dense<true> : vector<128x128xi1>
    %23 = arith.xori %22, %cst_15 : vector<128x128xi1>
    %24 = tpu.iota {dimensions = array<i32: 1>} : vector<1x128xi32>
    %c128_i32 = arith.constant 128 : i32
    %25 = arith.muli %arg1, %c128_i32 : i32
    %26 = vector.broadcast %25 : i32 to vector<1x128xi32>
    %27 = arith.addi %24, %26 : vector<1x128xi32>
    %c8_i32 = arith.constant 8 : i32
    %28 = vector.broadcast %c8_i32 : i32 to vector<1x128xi32>
    %29 = arith.cmpi slt, %27, %28 : vector<1x128xi32>
    %30 = vector.broadcast %29 : vector<1x128xi1> to vector<128x128xi1>
    %31 = arith.andi %22, %30 : vector<128x128xi1>
    %32 = vector.broadcast %29 : vector<1x128xi1> to vector<128x128xi1>
    %33 = arith.andi %23, %32 : vector<128x128xi1>
    %34 = arith.cmpi eq, %arg0, %arg1 : i32
    %35 = arith.extui %34 : i1 to i32
    %c0_i32_16 = arith.constant 0 : i32
    %36 = arith.cmpi ne, %35, %c0_i32_16 : i32
    scf.if %36 {
      %50 = tpu.iota {dimensions = array<i32: 0>} : vector<128x128xi32>
      %51 = tpu.iota {dimensions = array<i32: 1>} : vector<128x128xi32>
      %52 = arith.cmpi ne, %50, %51 : vector<128x128xi32>
      %53 = arith.andi %31, %52 : vector<128x128xi1>
      %cst_26 = arith.constant 0.000000e+00 : f32
      %54 = vector.broadcast %cst_26 : f32 to vector<128x128xf32>
      %55 = arith.select %53, %17, %54 : vector<128x128xi1>, vector<128x128xf32>
      %c0_27 = arith.constant 0 : index
      %c0_28 = arith.constant 0 : index
      %56 = vector.load %arg9[%c0_27, %c0_28] : memref<128x1xf32, #tpu.memory_space<vmem>>, vector<128x1xf32>
      %cst_29 = arith.constant dense<0xFF800000> : vector<128xf32>
      %57 = vector.multi_reduction <maximumf>, %55, %cst_29 [1] : vector<128x128xf32> to vector<128xf32>
      %58 = vector.shape_cast %57 : vector<128xf32> to vector<128x1xf32>
      %59 = arith.maximumf %56, %58 : vector<128x1xf32>
      %c0_30 = arith.constant 0 : index
      %c0_31 = arith.constant 0 : index
      %60 = vector.load %arg9[%c0_30, %c0_31] : memref<128x1xf32, #tpu.memory_space<vmem>>, vector<128x1xf32>
      tpu.vector_store %arg9[%c0_30, %c0_31], %59 {strides = array<i32>} : memref<128x1xf32, #tpu.memory_space<vmem>>, vector<128x1xf32>,
    } else {
    }
    %37 = arith.cmpi ne, %arg0, %arg1 : i32
    %38 = arith.extui %37 : i1 to i32
    %c0_i32_17 = arith.constant 0 : i32
    %39 = arith.cmpi ne, %38, %c0_i32_17 : i32
    scf.if %39 {
      %cst_26 = arith.constant 0.000000e+00 : f32
      %50 = vector.broadcast %cst_26 : f32 to vector<128x128xf32>
      %51 = arith.select %31, %17, %50 : vector<128x128xi1>, vector<128x128xf32>
      %c0_27 = arith.constant 0 : index
      %c0_28 = arith.constant 0 : index
      %52 = vector.load %arg9[%c0_27, %c0_28] : memref<128x1xf32, #tpu.memory_space<vmem>>, vector<128x1xf32>
      %cst_29 = arith.constant dense<0xFF800000> : vector<128xf32>
      %53 = vector.multi_reduction <maximumf>, %51, %cst_29 [1] : vector<128x128xf32> to vector<128xf32>
      %54 = vector.shape_cast %53 : vector<128xf32> to vector<128x1xf32>
      %55 = arith.maximumf %52, %54 : vector<128x1xf32>
      %c0_30 = arith.constant 0 : index
      %c0_31 = arith.constant 0 : index
      %56 = vector.load %arg9[%c0_30, %c0_31] : memref<128x1xf32, #tpu.memory_space<vmem>>, vector<128x1xf32>
      tpu.vector_store %arg9[%c0_30, %c0_31], %55 {strides = array<i32>} : memref<128x1xf32, #tpu.memory_space<vmem>>, vector<128x1xf32>,
    } else {
    }
    %cst_18 = arith.constant 0x7F800000 : f32
    %40 = vector.broadcast %cst_18 : f32 to vector<128x128xf32>
    %41 = arith.select %33, %17, %40 : vector<128x128xi1>, vector<128x128xf32>
    %c0_19 = arith.constant 0 : index
    %c0_20 = arith.constant 0 : index
    %42 = vector.load %arg10[%c0_19, %c0_20] : memref<128x1xf32, #tpu.memory_space<vmem>>, vector<128x1xf32>
    %cst_21 = arith.constant dense<0x7F800000> : vector<128xf32>
    %43 = vector.multi_reduction <minimumf>, %41, %cst_21 [1] : vector<128x128xf32> to vector<128xf32>
    %44 = vector.shape_cast %43 : vector<128xf32> to vector<128x1xf32>
    %45 = arith.minimumf %42, %44 : vector<128x1xf32>
    %c0_22 = arith.constant 0 : index
    %c0_23 = arith.constant 0 : index
    %46 = vector.load %arg10[%c0_22, %c0_23] : memref<128x1xf32, #tpu.memory_space<vmem>>, vector<128x1xf32>
    tpu.vector_store %arg10[%c0_22, %c0_23], %45 {strides = array<i32>} : memref<128x1xf32, #tpu.memory_space<vmem>>, vector<128x1xf32>,
    %c0_i32_24 = arith.constant 0 : i32
    %47 = arith.cmpi eq, %arg1, %c0_i32_24 : i32
    %48 = arith.extui %47 : i1 to i32
    %c0_i32_25 = arith.constant 0 : i32
    %49 = arith.cmpi ne, %48, %c0_i32_25 : i32
    scf.if %49 {
      %c0_26 = arith.constant 0 : index
      %c0_27 = arith.constant 0 : index
      %50 = vector.load %arg9[%c0_26, %c0_27] : memref<128x1xf32, #tpu.memory_space<vmem>>, vector<128x1xf32>
      %c0_28 = arith.constant 0 : index
      %c0_29 = arith.constant 0 : index
      %51 = vector.load %arg10[%c0_28, %c0_29] : memref<128x1xf32, #tpu.memory_space<vmem>>, vector<128x1xf32>
      %52 = arith.subf %50, %51 : vector<128x1xf32>
      %cst_30 = arith.constant 1.000000e+00 : f32
      %53 = vector.broadcast %cst_30 : f32 to vector<128x1xf32>
      %54 = arith.addf %52, %53 : vector<128x1xf32>
      %cst_31 = arith.constant 0.000000e+00 : f32
      %55 = vector.broadcast %cst_31 : f32 to vector<128x1xf32>
      %56 = arith.maximumf %54, %55 : vector<128x1xf32>
      %c0_32 = arith.constant 0 : index
      %c0_33 = arith.constant 0 : index
      %57 = vector.load %arg8[%c0_32, %c0_33] : memref<128x1xf32, #tpu.memory_space<vmem>>, vector<128x1xf32>
      tpu.vector_store %arg8[%c0_32, %c0_33], %56 {strides = array<i32>} : memref<128x1xf32, #tpu.memory_space<vmem>>, vector<128x1xf32>,
    } else {
    }
    return
  }
  func.func @transform_0(%arg0: i32, %arg1: i32) -> (i32, i32) {
    %c0_i32 = arith.constant 0 : i32
    %c0_i32_0 = arith.constant 0 : i32
    return %arg0, %c0_i32 : i32, i32
  }
  func.func @transform_1(%arg0: i32, %arg1: i32) -> (i32, i32) {
    %c0_i32 = arith.constant 0 : i32
    %c0_i32_0 = arith.constant 0 : i32
    return %arg1, %c0_i32 : i32, i32
  }
  func.func @transform_2(%arg0: i32, %arg1: i32) -> (i32, i32) {
    %c0_i32 = arith.constant 0 : i32
    %c0_i32_0 = arith.constant 0 : i32
    return %arg0, %c0_i32 : i32, i32
  }
  func.func @transform_3(%arg0: i32, %arg1: i32) -> (i32, i32) {
    %c0_i32 = arith.constant 0 : i32
    %c0_i32_0 = arith.constant 0 : i32
    return %c0_i32, %arg1 : i32, i32
  }
  func.func @transform_4(%arg0: i32, %arg1: i32) -> (i32, i32) {
    %c0_i32 = arith.constant 0 : i32
    %c0_i32_0 = arith.constant 0 : i32
    return %arg0, %c0_i32 : i32, i32
  }
  func.func @transform_5(%arg0: i32, %arg1: i32) -> (i32, i32) {
    %c0_i32 = arith.constant 0 : i32
    %c0_i32_0 = arith.constant 0 : i32
    return %c0_i32, %arg1 : i32, i32
  }
  func.func @transform_6(%arg0: i32, %arg1: i32) -> (i32, i32) {
    %c0_i32 = arith.constant 0 : i32
    %c0_i32_0 = arith.constant 0 : i32
    return %arg0, %c0_i32 : i32, i32
  }
}

</mosaic_0001>

<llo_original>
// kernel: tpu_custom_call.1
$region0: #{tpu_custom_call.1}
  #allocation0 [shape = 'u32[]', space=smem, size = 0x4, offset = 0x4, fixed_abs, tag = 'smem constant byte address 0x4 - core index']
  #allocation1 [shape = 'u32[72,128]{1,0:T(1,128)}', space=vmem, size = 0x9000, scoped, tag = 'internal scratch']
  #allocation2 [shape = 'f32[128,1]{1,0:T(8,128)}', space=vmem, size = 0x10000, scoped, tag = 'scratch operand']
  #allocation3 [shape = 'f32[128,1]{1,0:T(8,128)}', space=vmem, size = 0x10000, scoped, tag = 'scratch operand']
  %s0 = inlined_call_operand.vmem [shape: f32[128,128], index: 0, kind: input, shape index: {}]
  %s1 = inlined_call_operand.vmem [shape: f32[128,128], index: 1, kind: input, shape index: {}]
  %s2 = inlined_call_operand.vmem [shape: f32[128,1], index: 2, kind: input, shape index: {}]
  %s3 = inlined_call_operand.vmem [shape: f32[1,128], index: 3, kind: input, shape index: {}]
  %s4 = inlined_call_operand.vmem [shape: s32[128,1], index: 4, kind: input, shape index: {}]
  %s5 = inlined_call_operand.vmem [shape: s32[1,128], index: 5, kind: input, shape index: {}]
  %s6 = inlined_call_operand.vmem [shape: f32[128,1], index: 6, kind: output, shape index: {}]
  %s7 = sld [smem:[#allocation0]]
  $region50: #{tpu_custom_call.1} parent=0
    _
  %s9 = ssub.s32 1, %s7
  %s10 = scalar_select 0, %s9, %s7
  // Predicated region
  $region2: #{tpu_custom_call.1} parent=0 // pred_check
    _
  $region3: #{tpu_custom_call.1} parent=0 // pred_check_branch
    %12 = sbr.rel (0) target = $region5
  $region4: #{tpu_custom_call.1} parent=0 // pred_region
    _
  $region5: #{tpu_custom_call.1} parent=0 // pred_fallthru
    _
  // Predicated region
  $region6: #{tpu_custom_call.1} parent=0 // pred_check
    _
  $region7: #{tpu_custom_call.1} parent=0 // pred_check_branch
    %14 = sbr.rel (0) target = $region9
  $region8: #{tpu_custom_call.1} parent=0 // pred_region
    _
  $region9: #{tpu_custom_call.1} parent=0 // pred_fallthru
    _
  // Predicated region
  $region10: #{tpu_custom_call.1} parent=0 // pred_check
    _
  $region11: #{tpu_custom_call.1} parent=0 // pred_check_branch
    %16 = sbr.rel (0) target = $region13
  $region12: #{tpu_custom_call.1} parent=0 // pred_region
    _
  $region13: #{tpu_custom_call.1} parent=0 // pred_fallthru
    _
  // Predicated region
  $region14: #{tpu_custom_call.1} parent=0 // pred_check
    _
  $region15: #{tpu_custom_call.1} parent=0 // pred_check_branch
    %18 = sbr.rel (0) target = $region17
  $region16: #{tpu_custom_call.1} parent=0 // pred_region
    _
  $region17: #{tpu_custom_call.1} parent=0 // pred_fallthru
    _
  // Predicated region
  $region18: #{tpu_custom_call.1} parent=0 // pred_check
    _
  $region19: #{tpu_custom_call.1} parent=0 // pred_check_branch
    %20 = sbr.rel (0) target = $region21
  $region20: #{tpu_custom_call.1} parent=0 // pred_region
    _
  $region21: #{tpu_custom_call.1} parent=0 // pred_fallthru
    _
  // Predicated region
  $region22: #{tpu_custom_call.1} parent=0 // pred_check
    _
  $region23: #{tpu_custom_call.1} parent=0 // pred_check_branch
    %22 = sbr.rel (0) target = $region25
  $region24: #{tpu_custom_call.1} parent=0 // pred_region
    _
  $region25: #{tpu_custom_call.1} parent=0 // pred_fallthru
    _
  %p23 = scmp.eq.s32.totalorder 0, 0
  // Predicated region
  $region26: #{tpu_custom_call.1} parent=0 // pred_check
    %p24 = pneg %p23
  $region27: #{tpu_custom_call.1} parent=0 // pred_check_branch
    %26 = sbr.rel (%p24) target = $region29
  $region28: #{tpu_custom_call.1} parent=0 // pred_region
    %vm27 = vcmask 7168
    %28 = vst.msk [vmem:[#allocation2] sm:$0xff] %vm27, 0.0
    %29 = vst.msk [vmem:[#allocation2 + $0x8] sm:$0xff] %vm27, 0.0
    %30 = vst.msk [vmem:[#allocation2 + $0x10] sm:$0xff] %vm27, 0.0
    %31 = vst.msk [vmem:[#allocation2 + $0x18] sm:$0xff] %vm27, 0.0
    %32 = vst.msk [vmem:[#allocation2 + $0x20] sm:$0xff] %vm27, 0.0
    %33 = vst.msk [vmem:[#allocation2 + $0x28] sm:$0xff] %vm27, 0.0
    %34 = vst.msk [vmem:[#allocation2 + $0x30] sm:$0xff] %vm27, 0.0
    %35 = vst.msk [vmem:[#allocation2 + $0x38] sm:$0xff] %vm27, 0.0
    %36 = vst.msk [vmem:[#allocation2 + $0x40] sm:$0xff] %vm27, 0.0
    %37 = vst.msk [vmem:[#allocation2 + $0x48] sm:$0xff] %vm27, 0.0
    %38 = vst.msk [vmem:[#allocation2 + $0x50] sm:$0xff] %vm27, 0.0
    %39 = vst.msk [vmem:[#allocation2 + $0x58] sm:$0xff] %vm27, 0.0
    %40 = vst.msk [vmem:[#allocation2 + $0x60] sm:$0xff] %vm27, 0.0
    %41 = vst.msk [vmem:[#allocation2 + $0x68] sm:$0xff] %vm27, 0.0
    %42 = vst.msk [vmem:[#allocation2 + $0x70] sm:$0xff] %vm27, 0.0
    %43 = vst.msk [vmem:[#allocation2 + $0x78] sm:$0xff] %vm27, 0.0
    %44 = vst.msk [vmem:[#allocation3] sm:$0xff] %vm27, inf
    %45 = vst.msk [vmem:[#allocation3 + $0x8] sm:$0xff] %vm27, inf
    %46 = vst.msk [vmem:[#allocation3 + $0x10] sm:$0xff] %vm27, inf
    %47 = vst.msk [vmem:[#allocation3 + $0x18] sm:$0xff] %vm27, inf
    %48 = vst.msk [vmem:[#allocation3 + $0x20] sm:$0xff] %vm27, inf
    %49 = vst.msk [vmem:[#allocation3 + $0x28] sm:$0xff] %vm27, inf
    %50 = vst.msk [vmem:[#allocation3 + $0x30] sm:$0xff] %vm27, inf
    %51 = vst.msk [vmem:[#allocation3 + $0x38] sm:$0xff] %vm27, inf
    %52 = vst.msk [vmem:[#allocation3 + $0x40] sm:$0xff] %vm27, inf
    %53 = vst.msk [vmem:[#allocation3 + $0x48] sm:$0xff] %vm27, inf
    %54 = vst.msk [vmem:[#allocation3 + $0x50] sm:$0xff] %vm27, inf
    %55 = vst.msk [vmem:[#allocation3 + $0x58] sm:$0xff] %vm27, inf
    %56 = vst.msk [vmem:[#allocation3 + $0x60] sm:$0xff] %vm27, inf
    %57 = vst.msk [vmem:[#allocation3 + $0x68] sm:$0xff] %vm27, inf
    %58 = vst.msk [vmem:[#allocation3 + $0x70] sm:$0xff] %vm27, inf
    %59 = vst.msk [vmem:[#allocation3 + $0x78] sm:$0xff] %vm27, inf
  $region29: #{tpu_custom_call.1} parent=0 // pred_fallthru
    _
  %v60 = vld [vmem:[%s0] sm:$0xff]
  %v61 = vld [vmem:[%s0 + $0x8] sm:$0xff]
  %v62 = vld [vmem:[%s0 + $0x10] sm:$0xff]
  %v63 = vld [vmem:[%s0 + $0x18] sm:$0xff]
  %v64 = vld [vmem:[%s0 + $0x20] sm:$0xff]
  %v65 = vld [vmem:[%s0 + $0x28] sm:$0xff]
  %v66 = vld [vmem:[%s0 + $0x30] sm:$0xff]
  %v67 = vld [vmem:[%s0 + $0x38] sm:$0xff]
  %v68 = vld [vmem:[%s0 + $0x40] sm:$0xff]
  %v69 = vld [vmem:[%s0 + $0x48] sm:$0xff]
  %v70 = vld [vmem:[%s0 + $0x50] sm:$0xff]
  %v71 = vld [vmem:[%s0 + $0x58] sm:$0xff]
  %v72 = vld [vmem:[%s0 + $0x60] sm:$0xff]
  %v73 = vld [vmem:[%s0 + $0x68] sm:$0xff]
  %v74 = vld [vmem:[%s0 + $0x70] sm:$0xff]
  %v75 = vld [vmem:[%s0 + $0x78] sm:$0xff]
  %v76 = vld [vmem:[%s1] sm:$0xff]
  %v77 = vld [vmem:[%s1 + $0x8] sm:$0xff]
  %v78 = vld [vmem:[%s1 + $0x10] sm:$0xff]
  %v79 = vld [vmem:[%s1 + $0x18] sm:$0xff]
  %v80 = vld [vmem:[%s1 + $0x20] sm:$0xff]
  %v81 = vld [vmem:[%s1 + $0x28] sm:$0xff]
  %v82 = vld [vmem:[%s1 + $0x30] sm:$0xff]
  %v83 = vld [vmem:[%s1 + $0x38] sm:$0xff]
  %v84 = vld [vmem:[%s1 + $0x40] sm:$0xff]
  %v85 = vld [vmem:[%s1 + $0x48] sm:$0xff]
  %v86 = vld [vmem:[%s1 + $0x50] sm:$0xff]
  %v87 = vld [vmem:[%s1 + $0x58] sm:$0xff]
  %v88 = vld [vmem:[%s1 + $0x60] sm:$0xff]
  %v89 = vld [vmem:[%s1 + $0x68] sm:$0xff]
  %v90 = vld [vmem:[%s1 + $0x70] sm:$0xff]
  %v91 = vld [vmem:[%s1 + $0x78] sm:$0xff]
  %92 = vmatpush.xpose.msra.mxu0 %v91
  %93 = vmatpush.xpose.msra.mxu0 %v90
  %94 = vmatpush.xpose.msra.mxu0 %v89
  %95 = vmatpush.xpose.msra.mxu0 %v88
  %96 = vmatpush.xpose.msra.mxu0 %v87
  %97 = vmatpush.xpose.msra.mxu0 %v86
  %98 = vmatpush.xpose.msra.mxu0 %v85
  %99 = vmatpush.xpose.msra.mxu0 %v84
  %100 = vmatpush.xpose.msra.mxu0 %v83
  %101 = vmatpush.xpose.msra.mxu0 %v82
  %102 = vmatpush.xpose.msra.mxu0 %v81
  %103 = vmatpush.xpose.msra.mxu0 %v80
  %104 = vmatpush.xpose.msra.mxu0 %v79
  %105 = vmatpush.xpose.msra.mxu0 %v78
  %106 = vmatpush.xpose.msra.mxu0 %v77
  %107 = vmatpush.xpose.msra.mxu0 %v76
  %108 = vmatmul.f32.gmra.mxu0 %v60
  %v109 = vpop.f32.mrf.mxu0
  %v110 = vadd.f32 0.0, %v109
  %111 = vmatmul.f32.gmra.mxu0 %v61
  %v112 = vpop.f32.mrf.mxu0
  %v113 = vadd.f32 0.0, %v112
  %114 = vmatmul.f32.gmra.mxu0 %v62
  %v115 = vpop.f32.mrf.mxu0
  %v116 = vadd.f32 0.0, %v115
  %117 = vmatmul.f32.gmra.mxu0 %v63
  %v118 = vpop.f32.mrf.mxu0
  %v119 = vadd.f32 0.0, %v118
  %120 = vmatmul.f32.gmra.mxu0 %v64
  %v121 = vpop.f32.mrf.mxu0
  %v122 = vadd.f32 0.0, %v121
  %123 = vmatmul.f32.gmra.mxu0 %v65
  %v124 = vpop.f32.mrf.mxu0
  %v125 = vadd.f32 0.0, %v124
  %126 = vmatmul.f32.gmra.mxu0 %v66
  %v127 = vpop.f32.mrf.mxu0
  %v128 = vadd.f32 0.0, %v127
  %129 = vmatmul.f32.gmra.mxu0 %v67
  %v130 = vpop.f32.mrf.mxu0
  %v131 = vadd.f32 0.0, %v130
  %132 = vmatmul.f32.gmra.mxu0 %v68
  %v133 = vpop.f32.mrf.mxu0
  %v134 = vadd.f32 0.0, %v133
  %135 = vmatmul.f32.gmra.mxu0 %v69
  %v136 = vpop.f32.mrf.mxu0
  %v137 = vadd.f32 0.0, %v136
  %138 = vmatmul.f32.gmra.mxu0 %v70
  %v139 = vpop.f32.mrf.mxu0
  %v140 = vadd.f32 0.0, %v139
  %141 = vmatmul.f32.gmra.mxu0 %v71
  %v142 = vpop.f32.mrf.mxu0
  %v143 = vadd.f32 0.0, %v142
  %144 = vmatmul.f32.gmra.mxu0 %v72
  %v145 = vpop.f32.mrf.mxu0
  %v146 = vadd.f32 0.0, %v145
  %147 = vmatmul.f32.gmra.mxu0 %v73
  %v148 = vpop.f32.mrf.mxu0
  %v149 = vadd.f32 0.0, %v148
  %150 = vmatmul.f32.gmra.mxu0 %v74
  %v151 = vpop.f32.mrf.mxu0
  %v152 = vadd.f32 0.0, %v151
  %153 = vmatmul.f32.gmra.mxu0 %v75
  %v154 = vpop.f32.mrf.mxu0
  %v155 = vadd.f32 0.0, %v154
  %156 = vdwg.mxu0
  %v157 = vld [vmem:[%s2] sm:$0xff]
  %v158 = vld [vmem:[%s2 + $0x8] sm:$0xff]
  %v159 = vld [vmem:[%s2 + $0x10] sm:$0xff]
  %v160 = vld [vmem:[%s2 + $0x18] sm:$0xff]
  %v161 = vld [vmem:[%s2 + $0x20] sm:$0xff]
  %v162 = vld [vmem:[%s2 + $0x28] sm:$0xff]
  %v163 = vld [vmem:[%s2 + $0x30] sm:$0xff]
  %v164 = vld [vmem:[%s2 + $0x38] sm:$0xff]
  %v165 = vld [vmem:[%s2 + $0x40] sm:$0xff]
  %v166 = vld [vmem:[%s2 + $0x48] sm:$0xff]
  %v167 = vld [vmem:[%s2 + $0x50] sm:$0xff]
  %v168 = vld [vmem:[%s2 + $0x58] sm:$0xff]
  %v169 = vld [vmem:[%s2 + $0x60] sm:$0xff]
  %v170 = vld [vmem:[%s2 + $0x68] sm:$0xff]
  %v171 = vld [vmem:[%s2 + $0x70] sm:$0xff]
  %v172 = vld [vmem:[%s2 + $0x78] sm:$0xff]
  %v173 = vmul.f32 %v110, 2.0
  %v174 = vmul.f32 %v113, 2.0
  %v175 = vmul.f32 %v116, 2.0
  %v176 = vmul.f32 %v119, 2.0
  %v177 = vmul.f32 %v122, 2.0
  %v178 = vmul.f32 %v125, 2.0
  %v179 = vmul.f32 %v128, 2.0
  %v180 = vmul.f32 %v131, 2.0
  %v181 = vmul.f32 %v134, 2.0
  %v182 = vmul.f32 %v137, 2.0
  %v183 = vmul.f32 %v140, 2.0
  %v184 = vmul.f32 %v143, 2.0
  %v185 = vmul.f32 %v146, 2.0
  %v186 = vmul.f32 %v149, 2.0
  %v187 = vmul.f32 %v152, 2.0
  %v188 = vmul.f32 %v155, 2.0
  %190 = vset.pattern.permute.xlu0 0
  %191 = vperm.xlu0 %190, %v157
  %v192 = vpop.permute.xlu0 %191
  %195 = vset.pattern.permute.xlu0 0
  %196 = vperm.xlu0 %195, %v158
  %v197 = vpop.permute.xlu0 %196
  %200 = vset.pattern.permute.xlu0 0
  %201 = vperm.xlu0 %200, %v159
  %v202 = vpop.permute.xlu0 %201
  %205 = vset.pattern.permute.xlu0 0
  %206 = vperm.xlu0 %205, %v160
  %v207 = vpop.permute.xlu0 %206
  %210 = vset.pattern.permute.xlu0 0
  %211 = vperm.xlu0 %210, %v161
  %v212 = vpop.permute.xlu0 %211
  %215 = vset.pattern.permute.xlu0 0
  %216 = vperm.xlu0 %215, %v162
  %v217 = vpop.permute.xlu0 %216
  %220 = vset.pattern.permute.xlu0 0
  %221 = vperm.xlu0 %220, %v163
  %v222 = vpop.permute.xlu0 %221
  %225 = vset.pattern.permute.xlu0 0
  %226 = vperm.xlu0 %225, %v164
  %v227 = vpop.permute.xlu0 %226
  %230 = vset.pattern.permute.xlu0 0
  %231 = vperm.xlu0 %230, %v165
  %v232 = vpop.permute.xlu0 %231
  %235 = vset.pattern.permute.xlu0 0
  %236 = vperm.xlu0 %235, %v166
  %v237 = vpop.permute.xlu0 %236
  %240 = vset.pattern.permute.xlu0 0
  %241 = vperm.xlu0 %240, %v167
  %v242 = vpop.permute.xlu0 %241
  %245 = vset.pattern.permute.xlu0 0
  %246 = vperm.xlu0 %245, %v168
  %v247 = vpop.permute.xlu0 %246
  %250 = vset.pattern.permute.xlu0 0
  %251 = vperm.xlu0 %250, %v169
  %v252 = vpop.permute.xlu0 %251
  %255 = vset.pattern.permute.xlu0 0
  %256 = vperm.xlu0 %255, %v170
  %v257 = vpop.permute.xlu0 %256
  %260 = vset.pattern.permute.xlu0 0
  %261 = vperm.xlu0 %260, %v171
  %v262 = vpop.permute.xlu0 %261
  %265 = vset.pattern.permute.xlu0 0
  %266 = vperm.xlu0 %265, %v172
  %v267 = vpop.permute.xlu0 %266
  %v269 = vsub.f32 %v192, %v173
  %v270 = vsub.f32 %v197, %v174
  %v271 = vsub.f32 %v202, %v175
  %v272 = vsub.f32 %v207, %v176
  %v273 = vsub.f32 %v212, %v177
  %v274 = vsub.f32 %v217, %v178
  %v275 = vsub.f32 %v222, %v179
  %v276 = vsub.f32 %v227, %v180
  %v277 = vsub.f32 %v232, %v181
  %v278 = vsub.f32 %v237, %v182
  %v279 = vsub.f32 %v242, %v183
  %v280 = vsub.f32 %v247, %v184
  %v281 = vsub.f32 %v252, %v185
  %v282 = vsub.f32 %v257, %v186
  %v283 = vsub.f32 %v262, %v187
  %v284 = vsub.f32 %v267, %v188
  %v285 = vld [vmem:[%s3] sm:$0x1]
  %v287 = vperm.slane %v285, 0
  %v289 = vadd.f32 %v269, %v287
  %v290 = vadd.f32 %v270, %v287
  %v291 = vadd.f32 %v271, %v287
  %v292 = vadd.f32 %v272, %v287
  %v293 = vadd.f32 %v273, %v287
  %v294 = vadd.f32 %v274, %v287
  %v295 = vadd.f32 %v275, %v287
  %v296 = vadd.f32 %v276, %v287
  %v297 = vadd.f32 %v277, %v287
  %v298 = vadd.f32 %v278, %v287
  %v299 = vadd.f32 %v279, %v287
  %v300 = vadd.f32 %v280, %v287
  %v301 = vadd.f32 %v281, %v287
  %v302 = vadd.f32 %v282, %v287
  %v303 = vadd.f32 %v283, %v287
  %v304 = vadd.f32 %v284, %v287
  %v305 = vmax.f32 %v289, 0.0
  %v306 = vmax.f32 %v290, 0.0
  %v307 = vmax.f32 %v291, 0.0
  %v308 = vmax.f32 %v292, 0.0
  %v309 = vmax.f32 %v293, 0.0
  %v310 = vmax.f32 %v294, 0.0
  %v311 = vmax.f32 %v295, 0.0
  %v312 = vmax.f32 %v296, 0.0
  %v313 = vmax.f32 %v297, 0.0
  %v314 = vmax.f32 %v298, 0.0
  %v315 = vmax.f32 %v299, 0.0
  %v316 = vmax.f32 %v300, 0.0
  %v317 = vmax.f32 %v301, 0.0
  %v318 = vmax.f32 %v302, 0.0
  %v319 = vmax.f32 %v303, 0.0
  %v320 = vmax.f32 %v304, 0.0
  %v321 = vmul.f32 %v305, 0.125
  %v322 = vmul.f32 %v306, 0.125
  %v323 = vmul.f32 %v307, 0.125
  %v324 = vmul.f32 %v308, 0.125
  %v325 = vmul.f32 %v309, 0.125
  %v326 = vmul.f32 %v310, 0.125
  %v327 = vmul.f32 %v311, 0.125
  %v328 = vmul.f32 %v312, 0.125
  %v329 = vmul.f32 %v313, 0.125
  %v330 = vmul.f32 %v314, 0.125
  %v331 = vmul.f32 %v315, 0.125
  %v332 = vmul.f32 %v316, 0.125
  %v333 = vmul.f32 %v317, 0.125
  %v334 = vmul.f32 %v318, 0.125
  %v335 = vmul.f32 %v319, 0.125
  %v336 = vmul.f32 %v320, 0.125
  %v337 = vld [vmem:[%s4] sm:$0xff]
  %v338 = vld [vmem:[%s4 + $0x8] sm:$0xff]
  %v339 = vld [vmem:[%s4 + $0x10] sm:$0xff]
  %v340 = vld [vmem:[%s4 + $0x18] sm:$0xff]
  %v341 = vld [vmem:[%s4 + $0x20] sm:$0xff]
  %v342 = vld [vmem:[%s4 + $0x28] sm:$0xff]
  %v343 = vld [vmem:[%s4 + $0x30] sm:$0xff]
  %v344 = vld [vmem:[%s4 + $0x38] sm:$0xff]
  %v345 = vld [vmem:[%s4 + $0x40] sm:$0xff]
  %v346 = vld [vmem:[%s4 + $0x48] sm:$0xff]
  %v347 = vld [vmem:[%s4 + $0x50] sm:$0xff]
  %v348 = vld [vmem:[%s4 + $0x58] sm:$0xff]
  %v349 = vld [vmem:[%s4 + $0x60] sm:$0xff]
  %v350 = vld [vmem:[%s4 + $0x68] sm:$0xff]
  %v351 = vld [vmem:[%s4 + $0x70] sm:$0xff]
  %v352 = vld [vmem:[%s4 + $0x78] sm:$0xff]
  %v353 = vld [vmem:[%s5] sm:$0x1]
  %354 = vset.pattern.permute.xlu0 0
  %355 = vperm.xlu0 %354, %v337
  %v356 = vpop.permute.xlu0 %355
  %357 = vset.pattern.permute.xlu0 0
  %358 = vperm.xlu0 %357, %v338
  %v359 = vpop.permute.xlu0 %358
  %360 = vset.pattern.permute.xlu0 0
  %361 = vperm.xlu0 %360, %v339
  %v362 = vpop.permute.xlu0 %361
  %363 = vset.pattern.permute.xlu0 0
  %364 = vperm.xlu0 %363, %v340
  %v365 = vpop.permute.xlu0 %364
  %366 = vset.pattern.permute.xlu0 0
  %367 = vperm.xlu0 %366, %v341
  %v368 = vpop.permute.xlu0 %367
  %369 = vset.pattern.permute.xlu0 0
  %370 = vperm.xlu0 %369, %v342
  %v371 = vpop.permute.xlu0 %370
  %372 = vset.pattern.permute.xlu0 0
  %373 = vperm.xlu0 %372, %v343
  %v374 = vpop.permute.xlu0 %373
  %375 = vset.pattern.permute.xlu0 0
  %376 = vperm.xlu0 %375, %v344
  %v377 = vpop.permute.xlu0 %376
  %378 = vset.pattern.permute.xlu0 0
  %379 = vperm.xlu0 %378, %v345
  %v380 = vpop.permute.xlu0 %379
  %381 = vset.pattern.permute.xlu0 0
  %382 = vperm.xlu0 %381, %v346
  %v383 = vpop.permute.xlu0 %382
  %384 = vset.pattern.permute.xlu0 0
  %385 = vperm.xlu0 %384, %v347
  %v386 = vpop.permute.xlu0 %385
  %387 = vset.pattern.permute.xlu0 0
  %388 = vperm.xlu0 %387, %v348
  %v389 = vpop.permute.xlu0 %388
  %390 = vset.pattern.permute.xlu0 0
  %391 = vperm.xlu0 %390, %v349
  %v392 = vpop.permute.xlu0 %391
  %393 = vset.pattern.permute.xlu0 0
  %394 = vperm.xlu0 %393, %v350
  %v395 = vpop.permute.xlu0 %394
  %396 = vset.pattern.permute.xlu0 0
  %397 = vperm.xlu0 %396, %v351
  %v398 = vpop.permute.xlu0 %397
  %399 = vset.pattern.permute.xlu0 0
  %400 = vperm.xlu0 %399, %v352
  %v401 = vpop.permute.xlu0 %400
  %v402 = vperm.slane %v353, 0
  %vm403 = vcmp.eq.s32.totalorder %v356, %v402
  %vm404 = vcmp.eq.s32.totalorder %v359, %v402
  %vm405 = vcmp.eq.s32.totalorder %v362, %v402
  %vm406 = vcmp.eq.s32.totalorder %v365, %v402
  %vm407 = vcmp.eq.s32.totalorder %v368, %v402
  %vm408 = vcmp.eq.s32.totalorder %v371, %v402
  %vm409 = vcmp.eq.s32.totalorder %v374, %v402
  %vm410 = vcmp.eq.s32.totalorder %v377, %v402
  %vm411 = vcmp.eq.s32.totalorder %v380, %v402
  %vm412 = vcmp.eq.s32.totalorder %v383, %v402
  %vm413 = vcmp.eq.s32.totalorder %v386, %v402
  %vm414 = vcmp.eq.s32.totalorder %v389, %v402
  %vm415 = vcmp.eq.s32.totalorder %v392, %v402
  %vm416 = vcmp.eq.s32.totalorder %v395, %v402
  %vm417 = vcmp.eq.s32.totalorder %v398, %v402
  %vm418 = vcmp.eq.s32.totalorder %v401, %v402
  %vm419 = vmxor %vm403, 1
  %vm420 = vmxor %vm404, 1
  %vm421 = vmxor %vm405, 1
  %vm422 = vmxor %vm406, 1
  %vm423 = vmxor %vm407, 1
  %vm424 = vmxor %vm408, 1
  %vm425 = vmxor %vm409, 1
  %vm426 = vmxor %vm410, 1
  %vm427 = vmxor %vm411, 1
  %vm428 = vmxor %vm412, 1
  %vm429 = vmxor %vm413, 1
  %vm430 = vmxor %vm414, 1
  %vm431 = vmxor %vm415, 1
  %vm432 = vmxor %vm416, 1
  %vm433 = vmxor %vm417, 1
  %vm434 = vmxor %vm418, 1
  %v435 = vlaneseq
  %v436 = vand.u32 %v435, 127
  %s437 = smul.u32 0, 128
  %v438 = vstv %s437
  %v439 = vadd.s32 %v436, %v438
  %vm440 = vcmp.lt.s32.totalorder %v439, 8
  %v441 = vsel %vm440, 1, 0
  %vm442 = vcmp.eq.s32.totalorder %v441, 1
  %vm443 = vmand %vm403, %vm442
  %vm444 = vmand %vm404, %vm442
  %vm445 = vmand %vm405, %vm442
  %vm446 = vmand %vm406, %vm442
  %vm447 = vmand %vm407, %vm442
  %vm448 = vmand %vm408, %vm442
  %vm449 = vmand %vm409, %vm442
  %vm450 = vmand %vm410, %vm442
  %vm451 = vmand %vm411, %vm442
  %vm452 = vmand %vm412, %vm442
  %vm453 = vmand %vm413, %vm442
  %vm454 = vmand %vm414, %vm442
  %vm455 = vmand %vm415, %vm442
  %vm456 = vmand %vm416, %vm442
  %vm457 = vmand %vm417, %vm442
  %vm458 = vmand %vm418, %vm442
  %vm459 = vmand %vm419, %vm442
  %vm460 = vmand %vm420, %vm442
  %vm461 = vmand %vm421, %vm442
  %vm462 = vmand %vm422, %vm442
  %vm463 = vmand %vm423, %vm442
  %vm464 = vmand %vm424, %vm442
  %vm465 = vmand %vm425, %vm442
  %vm466 = vmand %vm426, %vm442
  %vm467 = vmand %vm427, %vm442
  %vm468 = vmand %vm428, %vm442
  %vm469 = vmand %vm429, %vm442
  %vm470 = vmand %vm430, %vm442
  %vm471 = vmand %vm431, %vm442
  %vm472 = vmand %vm432, %vm442
  %vm473 = vmand %vm433, %vm442
  %vm474 = vmand %vm434, %vm442
  %p475 = scmp.eq.s32.totalorder 0, 0
  // Predicated region
  $region30: #{tpu_custom_call.1} parent=0 // pred_check
    %p476 = pneg %p475
  $region31: #{tpu_custom_call.1} parent=0 // pred_check_branch
    %478 = sbr.rel (%p476) target = $region33
  $region32: #{tpu_custom_call.1} parent=0 // pred_region
    %v479 = vlaneseq
    %v480 = vshrl.u32 %v479, 7
    %v481 = vadd.s32 %v480, 8
    %v482 = vadd.s32 %v480, 16
    %v483 = vadd.s32 %v480, 24
    %v484 = vadd.s32 %v480, 32
    %v485 = vadd.s32 %v480, 40
    %v486 = vadd.s32 %v480, 48
    %v487 = vadd.s32 %v480, 56
    %v488 = vadd.s32 %v480, 64
    %v489 = vadd.s32 %v480, 72
    %v490 = vadd.s32 %v480, 80
    %v491 = vadd.s32 %v480, 88
    %v492 = vadd.s32 %v480, 96
    %v493 = vadd.s32 %v480, 104
    %v494 = vadd.s32 %v480, 112
    %v495 = vadd.s32 %v480, 120
    %vm496 = vcmp.ne.s32.totalorder %v480, %v436
    %vm497 = vcmp.ne.s32.totalorder %v481, %v436
    %vm498 = vcmp.ne.s32.totalorder %v482, %v436
    %vm499 = vcmp.ne.s32.totalorder %v483, %v436
    %vm500 = vcmp.ne.s32.totalorder %v484, %v436
    %vm501 = vcmp.ne.s32.totalorder %v485, %v436
    %vm502 = vcmp.ne.s32.totalorder %v486, %v436
    %vm503 = vcmp.ne.s32.totalorder %v487, %v436
    %vm504 = vcmp.ne.s32.totalorder %v488, %v436
    %vm505 = vcmp.ne.s32.totalorder %v489, %v436
    %vm506 = vcmp.ne.s32.totalorder %v490, %v436
    %vm507 = vcmp.ne.s32.totalorder %v491, %v436
    %vm508 = vcmp.ne.s32.totalorder %v492, %v436
    %vm509 = vcmp.ne.s32.totalorder %v493, %v436
    %vm510 = vcmp.ne.s32.totalorder %v494, %v436
    %vm511 = vcmp.ne.s32.totalorder %v495, %v436
    %vm512 = vmand %vm443, %vm496
    %vm513 = vmand %vm444, %vm497
    %vm514 = vmand %vm445, %vm498
    %vm515 = vmand %vm446, %vm499
    %vm516 = vmand %vm447, %vm500
    %vm517 = vmand %vm448, %vm501
    %vm518 = vmand %vm449, %vm502
    %vm519 = vmand %vm450, %vm503
    %vm520 = vmand %vm451, %vm504
    %vm521 = vmand %vm452, %vm505
    %vm522 = vmand %vm453, %vm506
    %vm523 = vmand %vm454, %vm507
    %vm524 = vmand %vm455, %vm508
    %vm525 = vmand %vm456, %vm509
    %vm526 = vmand %vm457, %vm510
    %vm527 = vmand %vm458, %vm511
    %v528 = vsel %vm512, %v321, 0.0
    %v529 = vsel %vm513, %v322, 0.0
    %v530 = vsel %vm514, %v323, 0.0
    %v531 = vsel %vm515, %v324, 0.0
    %v532 = vsel %vm516, %v325, 0.0
    %v533 = vsel %vm517, %v326, 0.0
    %v534 = vsel %vm518, %v327, 0.0
    %v535 = vsel %vm519, %v328, 0.0
    %v536 = vsel %vm520, %v329, 0.0
    %v537 = vsel %vm521, %v330, 0.0
    %v538 = vsel %vm522, %v331, 0.0
    %v539 = vsel %vm523, %v332, 0.0
    %v540 = vsel %vm524, %v333, 0.0
    %v541 = vsel %vm525, %v334, 0.0
    %v542 = vsel %vm526, %v335, 0.0
    %v543 = vsel %vm527, %v336, 0.0
    %v544 = vld [vmem:[#allocation2] sm:$0xff]
    %v545 = vld [vmem:[#allocation2 + $0x8] sm:$0xff]
    %v546 = vld [vmem:[#allocation2 + $0x10] sm:$0xff]
    %v547 = vld [vmem:[#allocation2 + $0x18] sm:$0xff]
    %v548 = vld [vmem:[#allocation2 + $0x20] sm:$0xff]
    %v549 = vld [vmem:[#allocation2 + $0x28] sm:$0xff]
    %v550 = vld [vmem:[#allocation2 + $0x30] sm:$0xff]
    %v551 = vld [vmem:[#allocation2 + $0x38] sm:$0xff]
    %v552 = vld [vmem:[#allocation2 + $0x40] sm:$0xff]
    %v553 = vld [vmem:[#allocation2 + $0x48] sm:$0xff]
    %v554 = vld [vmem:[#allocation2 + $0x50] sm:$0xff]
    %v555 = vld [vmem:[#allocation2 + $0x58] sm:$0xff]
    %v556 = vld [vmem:[#allocation2 + $0x60] sm:$0xff]
    %v557 = vld [vmem:[#allocation2 + $0x68] sm:$0xff]
    %v558 = vld [vmem:[#allocation2 + $0x70] sm:$0xff]
    %v559 = vld [vmem:[#allocation2 + $0x78] sm:$0xff]
    %560 = vmax.xlane.f32.xlu0 %v528
    %v561 = vpop.xlane.xlu0 %560
    %562 = vmax.xlane.f32.xlu0 %v529
    %v563 = vpop.xlane.xlu0 %562
    %564 = vmax.xlane.f32.xlu0 %v530
    %v565 = vpop.xlane.xlu0 %564
    %566 = vmax.xlane.f32.xlu0 %v531
    %v567 = vpop.xlane.xlu0 %566
    %568 = vmax.xlane.f32.xlu0 %v532
    %v569 = vpop.xlane.xlu0 %568
    %570 = vmax.xlane.f32.xlu0 %v533
    %v571 = vpop.xlane.xlu0 %570
    %572 = vmax.xlane.f32.xlu0 %v534
    %v573 = vpop.xlane.xlu0 %572
    %574 = vmax.xlane.f32.xlu0 %v535
    %v575 = vpop.xlane.xlu0 %574
    %576 = vmax.xlane.f32.xlu0 %v536
    %v577 = vpop.xlane.xlu0 %576
    %578 = vmax.xlane.f32.xlu0 %v537
    %v579 = vpop.xlane.xlu0 %578
    %580 = vmax.xlane.f32.xlu0 %v538
    %v581 = vpop.xlane.xlu0 %580
    %582 = vmax.xlane.f32.xlu0 %v539
    %v583 = vpop.xlane.xlu0 %582
    %584 = vmax.xlane.f32.xlu0 %v540
    %v585 = vpop.xlane.xlu0 %584
    %586 = vmax.xlane.f32.xlu0 %v541
    %v587 = vpop.xlane.xlu0 %586
    %588 = vmax.xlane.f32.xlu0 %v542
    %v589 = vpop.xlane.xlu0 %588
    %590 = vmax.xlane.f32.xlu0 %v543
    %v591 = vpop.xlane.xlu0 %590
    %v592 = vmax.f32 %v544, %v561
    %v593 = vmax.f32 %v545, %v563
    %v594 = vmax.f32 %v546, %v565
    %v595 = vmax.f32 %v547, %v567
    %v596 = vmax.f32 %v548, %v569
    %v597 = vmax.f32 %v549, %v571
    %v598 = vmax.f32 %v550, %v573
    %v599 = vmax.f32 %v551, %v575
    %v600 = vmax.f32 %v552, %v577
    %v601 = vmax.f32 %v553, %v579
    %v602 = vmax.f32 %v554, %v581
    %v603 = vmax.f32 %v555, %v583
    %v604 = vmax.f32 %v556, %v585
    %v605 = vmax.f32 %v557, %v587
    %v606 = vmax.f32 %v558, %v589
    %v607 = vmax.f32 %v559, %v591
    %vm608 = vcmask 7168
    %609 = vst.msk [vmem:[#allocation2] sm:$0xff] %vm608, %v592
    %610 = vst.msk [vmem:[#allocation2 + $0x8] sm:$0xff] %vm608, %v593
    %611 = vst.msk [vmem:[#allocation2 + $0x10] sm:$0xff] %vm608, %v594
    %612 = vst.msk [vmem:[#allocation2 + $0x18] sm:$0xff] %vm608, %v595
    %613 = vst.msk [vmem:[#allocation2 + $0x20] sm:$0xff] %vm608, %v596
    %614 = vst.msk [vmem:[#allocation2 + $0x28] sm:$0xff] %vm608, %v597
    %615 = vst.msk [vmem:[#allocation2 + $0x30] sm:$0xff] %vm608, %v598
    %616 = vst.msk [vmem:[#allocation2 + $0x38] sm:$0xff] %vm608, %v599
    %617 = vst.msk [vmem:[#allocation2 + $0x40] sm:$0xff] %vm608, %v600
    %618 = vst.msk [vmem:[#allocation2 + $0x48] sm:$0xff] %vm608, %v601
    %619 = vst.msk [vmem:[#allocation2 + $0x50] sm:$0xff] %vm608, %v602
    %620 = vst.msk [vmem:[#allocation2 + $0x58] sm:$0xff] %vm608, %v603
    %621 = vst.msk [vmem:[#allocation2 + $0x60] sm:$0xff] %vm608, %v604
    %622 = vst.msk [vmem:[#allocation2 + $0x68] sm:$0xff] %vm608, %v605
    %623 = vst.msk [vmem:[#allocation2 + $0x70] sm:$0xff] %vm608, %v606
    %624 = vst.msk [vmem:[#allocation2 + $0x78] sm:$0xff] %vm608, %v607
  $region33: #{tpu_custom_call.1} parent=0 // pred_fallthru
    _
  %p625 = scmp.ne.s32.totalorder 0, 0
  // Predicated region
  $region34: #{tpu_custom_call.1} parent=0 // pred_check
    %p626 = pneg %p625
  $region35: #{tpu_custom_call.1} parent=0 // pred_check_branch
    %628 = sbr.rel (%p626) target = $region37
  $region36: #{tpu_custom_call.1} parent=0 // pred_region
    %v629 = vsel %vm443, %v321, 0.0
    %v630 = vsel %vm444, %v322, 0.0
    %v631 = vsel %vm445, %v323, 0.0
    %v632 = vsel %vm446, %v324, 0.0
    %v633 = vsel %vm447, %v325, 0.0
    %v634 = vsel %vm448, %v326, 0.0
    %v635 = vsel %vm449, %v327, 0.0
    %v636 = vsel %vm450, %v328, 0.0
    %v637 = vsel %vm451, %v329, 0.0
    %v638 = vsel %vm452, %v330, 0.0
    %v639 = vsel %vm453, %v331, 0.0
    %v640 = vsel %vm454, %v332, 0.0
    %v641 = vsel %vm455, %v333, 0.0
    %v642 = vsel %vm456, %v334, 0.0
    %v643 = vsel %vm457, %v335, 0.0
    %v644 = vsel %vm458, %v336, 0.0
    %v645 = vld [vmem:[#allocation2] sm:$0xff]
    %v646 = vld [vmem:[#allocation2 + $0x8] sm:$0xff]
    %v647 = vld [vmem:[#allocation2 + $0x10] sm:$0xff]
    %v648 = vld [vmem:[#allocation2 + $0x18] sm:$0xff]
    %v649 = vld [vmem:[#allocation2 + $0x20] sm:$0xff]
    %v650 = vld [vmem:[#allocation2 + $0x28] sm:$0xff]
    %v651 = vld [vmem:[#allocation2 + $0x30] sm:$0xff]
    %v652 = vld [vmem:[#allocation2 + $0x38] sm:$0xff]
    %v653 = vld [vmem:[#allocation2 + $0x40] sm:$0xff]
    %v654 = vld [vmem:[#allocation2 + $0x48] sm:$0xff]
    %v655 = vld [vmem:[#allocation2 + $0x50] sm:$0xff]
    %v656 = vld [vmem:[#allocation2 + $0x58] sm:$0xff]
    %v657 = vld [vmem:[#allocation2 + $0x60] sm:$0xff]
    %v658 = vld [vmem:[#allocation2 + $0x68] sm:$0xff]
    %v659 = vld [vmem:[#allocation2 + $0x70] sm:$0xff]
    %v660 = vld [vmem:[#allocation2 + $0x78] sm:$0xff]
    %661 = vmax.xlane.f32.xlu0 %v629
    %v662 = vpop.xlane.xlu0 %661
    %663 = vmax.xlane.f32.xlu0 %v630
    %v664 = vpop.xlane.xlu0 %663
    %665 = vmax.xlane.f32.xlu0 %v631
    %v666 = vpop.xlane.xlu0 %665
    %667 = vmax.xlane.f32.xlu0 %v632
    %v668 = vpop.xlane.xlu0 %667
    %669 = vmax.xlane.f32.xlu0 %v633
    %v670 = vpop.xlane.xlu0 %669
    %671 = vmax.xlane.f32.xlu0 %v634
    %v672 = vpop.xlane.xlu0 %671
    %673 = vmax.xlane.f32.xlu0 %v635
    %v674 = vpop.xlane.xlu0 %673
    %675 = vmax.xlane.f32.xlu0 %v636
    %v676 = vpop.xlane.xlu0 %675
    %677 = vmax.xlane.f32.xlu0 %v637
    %v678 = vpop.xlane.xlu0 %677
    %679 = vmax.xlane.f32.xlu0 %v638
    %v680 = vpop.xlane.xlu0 %679
    %681 = vmax.xlane.f32.xlu0 %v639
    %v682 = vpop.xlane.xlu0 %681
    %683 = vmax.xlane.f32.xlu0 %v640
    %v684 = vpop.xlane.xlu0 %683
    %685 = vmax.xlane.f32.xlu0 %v641
    %v686 = vpop.xlane.xlu0 %685
    %687 = vmax.xlane.f32.xlu0 %v642
    %v688 = vpop.xlane.xlu0 %687
    %689 = vmax.xlane.f32.xlu0 %v643
    %v690 = vpop.xlane.xlu0 %689
    %691 = vmax.xlane.f32.xlu0 %v644
    %v692 = vpop.xlane.xlu0 %691
    %v693 = vmax.f32 %v645, %v662
    %v694 = vmax.f32 %v646, %v664
    %v695 = vmax.f32 %v647, %v666
    %v696 = vmax.f32 %v648, %v668
    %v697 = vmax.f32 %v649, %v670
    %v698 = vmax.f32 %v650, %v672
    %v699 = vmax.f32 %v651, %v674
    %v700 = vmax.f32 %v652, %v676
    %v701 = vmax.f32 %v653, %v678
    %v702 = vmax.f32 %v654, %v680
    %v703 = vmax.f32 %v655, %v682
    %v704 = vmax.f32 %v656, %v684
    %v705 = vmax.f32 %v657, %v686
    %v706 = vmax.f32 %v658, %v688
    %v707 = vmax.f32 %v659, %v690
    %v708 = vmax.f32 %v660, %v692
    %vm709 = vcmask 7168
    %710 = vst.msk [vmem:[#allocation2] sm:$0xff] %vm709, %v693
    %711 = vst.msk [vmem:[#allocation2 + $0x8] sm:$0xff] %vm709, %v694
    %712 = vst.msk [vmem:[#allocation2 + $0x10] sm:$0xff] %vm709, %v695
    %713 = vst.msk [vmem:[#allocation2 + $0x18] sm:$0xff] %vm709, %v696
    %714 = vst.msk [vmem:[#allocation2 + $0x20] sm:$0xff] %vm709, %v697
    %715 = vst.msk [vmem:[#allocation2 + $0x28] sm:$0xff] %vm709, %v698
    %716 = vst.msk [vmem:[#allocation2 + $0x30] sm:$0xff] %vm709, %v699
    %717 = vst.msk [vmem:[#allocation2 + $0x38] sm:$0xff] %vm709, %v700
    %718 = vst.msk [vmem:[#allocation2 + $0x40] sm:$0xff] %vm709, %v701
    %719 = vst.msk [vmem:[#allocation2 + $0x48] sm:$0xff] %vm709, %v702
    %720 = vst.msk [vmem:[#allocation2 + $0x50] sm:$0xff] %vm709, %v703
    %721 = vst.msk [vmem:[#allocation2 + $0x58] sm:$0xff] %vm709, %v704
    %722 = vst.msk [vmem:[#allocation2 + $0x60] sm:$0xff] %vm709, %v705
    %723 = vst.msk [vmem:[#allocation2 + $0x68] sm:$0xff] %vm709, %v706
    %724 = vst.msk [vmem:[#allocation2 + $0x70] sm:$0xff] %vm709, %v707
    %725 = vst.msk [vmem:[#allocation2 + $0x78] sm:$0xff] %vm709, %v708
  $region37: #{tpu_custom_call.1} parent=0 // pred_fallthru
    _
  %v726 = vsel %vm459, %v321, inf
  %v727 = vsel %vm460, %v322, inf
  %v728 = vsel %vm461, %v323, inf
  %v729 = vsel %vm462, %v324, inf
  %v730 = vsel %vm463, %v325, inf
  %v731 = vsel %vm464, %v326, inf
  %v732 = vsel %vm465, %v327, inf
  %v733 = vsel %vm466, %v328, inf
  %v734 = vsel %vm467, %v329, inf
  %v735 = vsel %vm468, %v330, inf
  %v736 = vsel %vm469, %v331, inf
  %v737 = vsel %vm470, %v332, inf
  %v738 = vsel %vm471, %v333, inf
  %v739 = vsel %vm472, %v334, inf
  %v740 = vsel %vm473, %v335, inf
  %v741 = vsel %vm474, %v336, inf
  %v742 = vld [vmem:[#allocation3] sm:$0xff]
  %v743 = vld [vmem:[#allocation3 + $0x8] sm:$0xff]
  %v744 = vld [vmem:[#allocation3 + $0x10] sm:$0xff]
  %v745 = vld [vmem:[#allocation3 + $0x18] sm:$0xff]
  %v746 = vld [vmem:[#allocation3 + $0x20] sm:$0xff]
  %v747 = vld [vmem:[#allocation3 + $0x28] sm:$0xff]
  %v748 = vld [vmem:[#allocation3 + $0x30] sm:$0xff]
  %v749 = vld [vmem:[#allocation3 + $0x38] sm:$0xff]
  %v750 = vld [vmem:[#allocation3 + $0x40] sm:$0xff]
  %v751 = vld [vmem:[#allocation3 + $0x48] sm:$0xff]
  %v752 = vld [vmem:[#allocation3 + $0x50] sm:$0xff]
  %v753 = vld [vmem:[#allocation3 + $0x58] sm:$0xff]
  %v754 = vld [vmem:[#allocation3 + $0x60] sm:$0xff]
  %v755 = vld [vmem:[#allocation3 + $0x68] sm:$0xff]
  %v756 = vld [vmem:[#allocation3 + $0x70] sm:$0xff]
  %v757 = vld [vmem:[#allocation3 + $0x78] sm:$0xff]
  %758 = vmin.xlane.f32.xlu0 %v726
  %v759 = vpop.xlane.xlu0 %758
  %760 = vmin.xlane.f32.xlu0 %v727
  %v761 = vpop.xlane.xlu0 %760
  %762 = vmin.xlane.f32.xlu0 %v728
  %v763 = vpop.xlane.xlu0 %762
  %764 = vmin.xlane.f32.xlu0 %v729
  %v765 = vpop.xlane.xlu0 %764
  %766 = vmin.xlane.f32.xlu0 %v730
  %v767 = vpop.xlane.xlu0 %766
  %768 = vmin.xlane.f32.xlu0 %v731
  %v769 = vpop.xlane.xlu0 %768
  %770 = vmin.xlane.f32.xlu0 %v732
  %v771 = vpop.xlane.xlu0 %770
  %772 = vmin.xlane.f32.xlu0 %v733
  %v773 = vpop.xlane.xlu0 %772
  %774 = vmin.xlane.f32.xlu0 %v734
  %v775 = vpop.xlane.xlu0 %774
  %776 = vmin.xlane.f32.xlu0 %v735
  %v777 = vpop.xlane.xlu0 %776
  %778 = vmin.xlane.f32.xlu0 %v736
  %v779 = vpop.xlane.xlu0 %778
  %780 = vmin.xlane.f32.xlu0 %v737
  %v781 = vpop.xlane.xlu0 %780
  %782 = vmin.xlane.f32.xlu0 %v738
  %v783 = vpop.xlane.xlu0 %782
  %784 = vmin.xlane.f32.xlu0 %v739
  %v785 = vpop.xlane.xlu0 %784
  %786 = vmin.xlane.f32.xlu0 %v740
  %v787 = vpop.xlane.xlu0 %786
  %788 = vmin.xlane.f32.xlu0 %v741
  %v789 = vpop.xlane.xlu0 %788
  %v790 = vmin.f32 %v742, %v759
  %v791 = vmin.f32 %v743, %v761
  %v792 = vmin.f32 %v744, %v763
  %v793 = vmin.f32 %v745, %v765
  %v794 = vmin.f32 %v746, %v767
  %v795 = vmin.f32 %v747, %v769
  %v796 = vmin.f32 %v748, %v771
  %v797 = vmin.f32 %v749, %v773
  %v798 = vmin.f32 %v750, %v775
  %v799 = vmin.f32 %v751, %v777
  %v800 = vmin.f32 %v752, %v779
  %v801 = vmin.f32 %v753, %v781
  %v802 = vmin.f32 %v754, %v783
  %v803 = vmin.f32 %v755, %v785
  %v804 = vmin.f32 %v756, %v787
  %v805 = vmin.f32 %v757, %v789
  %vm806 = vcmask 7168
  %807 = vst.msk [vmem:[#allocation3] sm:$0xff] %vm806, %v790
  %808 = vst.msk [vmem:[#allocation3 + $0x8] sm:$0xff] %vm806, %v791
  %809 = vst.msk [vmem:[#allocation3 + $0x10] sm:$0xff] %vm806, %v792
  %810 = vst.msk [vmem:[#allocation3 + $0x18] sm:$0xff] %vm806, %v793
  %811 = vst.msk [vmem:[#allocation3 + $0x20] sm:$0xff] %vm806, %v794
  %812 = vst.msk [vmem:[#allocation3 + $0x28] sm:$0xff] %vm806, %v795
  %813 = vst.msk [vmem:[#allocation3 + $0x30] sm:$0xff] %vm806, %v796
  %814 = vst.msk [vmem:[#allocation3 + $0x38] sm:$0xff] %vm806, %v797
  %815 = vst.msk [vmem:[#allocation3 + $0x40] sm:$0xff] %vm806, %v798
  %816 = vst.msk [vmem:[#allocation3 + $0x48] sm:$0xff] %vm806, %v799
  %817 = vst.msk [vmem:[#allocation3 + $0x50] sm:$0xff] %vm806, %v800
  %818 = vst.msk [vmem:[#allocation3 + $0x58] sm:$0xff] %vm806, %v801
  %819 = vst.msk [vmem:[#allocation3 + $0x60] sm:$0xff] %vm806, %v802
  %820 = vst.msk [vmem:[#allocation3 + $0x68] sm:$0xff] %vm806, %v803
  %821 = vst.msk [vmem:[#allocation3 + $0x70] sm:$0xff] %vm806, %v804
  %822 = vst.msk [vmem:[#allocation3 + $0x78] sm:$0xff] %vm806, %v805
  // Predicated region
  $region38: #{tpu_custom_call.1} parent=0 // pred_check
    %p823 = pneg %p23
  $region39: #{tpu_custom_call.1} parent=0 // pred_check_branch
    %825 = sbr.rel (%p823) target = $region41
  $region40: #{tpu_custom_call.1} parent=0 // pred_region
    %v826 = vld [vmem:[#allocation2] sm:$0xff]
    %v827 = vld [vmem:[#allocation2 + $0x8] sm:$0xff]
    %v828 = vld [vmem:[#allocation2 + $0x10] sm:$0xff]
    %v829 = vld [vmem:[#allocation2 + $0x18] sm:$0xff]
    %v830 = vld [vmem:[#allocation2 + $0x20] sm:$0xff]
    %v831 = vld [vmem:[#allocation2 + $0x28] sm:$0xff]
    %v832 = vld [vmem:[#allocation2 + $0x30] sm:$0xff]
    %v833 = vld [vmem:[#allocation2 + $0x38] sm:$0xff]
    %v834 = vld [vmem:[#allocation2 + $0x40] sm:$0xff]
    %v835 = vld [vmem:[#allocation2 + $0x48] sm:$0xff]
    %v836 = vld [vmem:[#allocation2 + $0x50] sm:$0xff]
    %v837 = vld [vmem:[#allocation2 + $0x58] sm:$0xff]
    %v838 = vld [vmem:[#allocation2 + $0x60] sm:$0xff]
    %v839 = vld [vmem:[#allocation2 + $0x68] sm:$0xff]
    %v840 = vld [vmem:[#allocation2 + $0x70] sm:$0xff]
    %v841 = vld [vmem:[#allocation2 + $0x78] sm:$0xff]
    %v842 = vld [vmem:[#allocation3] sm:$0xff]
    %v843 = vld [vmem:[#allocation3 + $0x8] sm:$0xff]
    %v844 = vld [vmem:[#allocation3 + $0x10] sm:$0xff]
    %v845 = vld [vmem:[#allocation3 + $0x18] sm:$0xff]
    %v846 = vld [vmem:[#allocation3 + $0x20] sm:$0xff]
    %v847 = vld [vmem:[#allocation3 + $0x28] sm:$0xff]
    %v848 = vld [vmem:[#allocation3 + $0x30] sm:$0xff]
    %v849 = vld [vmem:[#allocation3 + $0x38] sm:$0xff]
    %v850 = vld [vmem:[#allocation3 + $0x40] sm:$0xff]
    %v851 = vld [vmem:[#allocation3 + $0x48] sm:$0xff]
    %v852 = vld [vmem:[#allocation3 + $0x50] sm:$0xff]
    %v853 = vld [vmem:[#allocation3 + $0x58] sm:$0xff]
    %v854 = vld [vmem:[#allocation3 + $0x60] sm:$0xff]
    %v855 = vld [vmem:[#allocation3 + $0x68] sm:$0xff]
    %v856 = vld [vmem:[#allocation3 + $0x70] sm:$0xff]
    %v857 = vld [vmem:[#allocation3 + $0x78] sm:$0xff]
    %v858 = vsub.f32 %v826, %v842
    %v859 = vsub.f32 %v827, %v843
    %v860 = vsub.f32 %v828, %v844
    %v861 = vsub.f32 %v829, %v845
    %v862 = vsub.f32 %v830, %v846
    %v863 = vsub.f32 %v831, %v847
    %v864 = vsub.f32 %v832, %v848
    %v865 = vsub.f32 %v833, %v849
    %v866 = vsub.f32 %v834, %v850
    %v867 = vsub.f32 %v835, %v851
    %v868 = vsub.f32 %v836, %v852
    %v869 = vsub.f32 %v837, %v853
    %v870 = vsub.f32 %v838, %v854
    %v871 = vsub.f32 %v839, %v855
    %v872 = vsub.f32 %v840, %v856
    %v873 = vsub.f32 %v841, %v857
    %v874 = vadd.f32 %v858, 1.0
    %v875 = vadd.f32 %v859, 1.0
    %v876 = vadd.f32 %v860, 1.0
    %v877 = vadd.f32 %v861, 1.0
    %v878 = vadd.f32 %v862, 1.0
    %v879 = vadd.f32 %v863, 1.0
    %v880 = vadd.f32 %v864, 1.0
    %v881 = vadd.f32 %v865, 1.0
    %v882 = vadd.f32 %v866, 1.0
    %v883 = vadd.f32 %v867, 1.0
    %v884 = vadd.f32 %v868, 1.0
    %v885 = vadd.f32 %v869, 1.0
    %v886 = vadd.f32 %v870, 1.0
    %v887 = vadd.f32 %v871, 1.0
    %v888 = vadd.f32 %v872, 1.0
    %v889 = vadd.f32 %v873, 1.0
    %v890 = vmax.f32 %v874, 0.0
    %v891 = vmax.f32 %v875, 0.0
    %v892 = vmax.f32 %v876, 0.0
    %v893 = vmax.f32 %v877, 0.0
    %v894 = vmax.f32 %v878, 0.0
    %v895 = vmax.f32 %v879, 0.0
    %v896 = vmax.f32 %v880, 0.0
    %v897 = vmax.f32 %v881, 0.0
    %v898 = vmax.f32 %v882, 0.0
    %v899 = vmax.f32 %v883, 0.0
    %v900 = vmax.f32 %v884, 0.0
    %v901 = vmax.f32 %v885, 0.0
    %v902 = vmax.f32 %v886, 0.0
    %v903 = vmax.f32 %v887, 0.0
    %v904 = vmax.f32 %v888, 0.0
    %v905 = vmax.f32 %v889, 0.0
    %906 = vst.msk [vmem:[%s6] sm:$0xff] %vm806, %v890
    %907 = vst.msk [vmem:[%s6 + $0x8] sm:$0xff] %vm806, %v891
    %908 = vst.msk [vmem:[%s6 + $0x10] sm:$0xff] %vm806, %v892
    %909 = vst.msk [vmem:[%s6 + $0x18] sm:$0xff] %vm806, %v893
    %910 = vst.msk [vmem:[%s6 + $0x20] sm:$0xff] %vm806, %v894
    %911 = vst.msk [vmem:[%s6 + $0x28] sm:$0xff] %vm806, %v895
    %912 = vst.msk [vmem:[%s6 + $0x30] sm:$0xff] %vm806, %v896
    %913 = vst.msk [vmem:[%s6 + $0x38] sm:$0xff] %vm806, %v897
    %914 = vst.msk [vmem:[%s6 + $0x40] sm:$0xff] %vm806, %v898
    %915 = vst.msk [vmem:[%s6 + $0x48] sm:$0xff] %vm806, %v899
    %916 = vst.msk [vmem:[%s6 + $0x50] sm:$0xff] %vm806, %v900
    %917 = vst.msk [vmem:[%s6 + $0x58] sm:$0xff] %vm806, %v901
    %918 = vst.msk [vmem:[%s6 + $0x60] sm:$0xff] %vm806, %v902
    %919 = vst.msk [vmem:[%s6 + $0x68] sm:$0xff] %vm806, %v903
    %920 = vst.msk [vmem:[%s6 + $0x70] sm:$0xff] %vm806, %v904
    %921 = vst.msk [vmem:[%s6 + $0x78] sm:$0xff] %vm806, %v905
  $region41: #{tpu_custom_call.1} parent=0 // pred_fallthru
    _
  // Predicated region
  $region42: #{tpu_custom_call.1} parent=0 // pred_check
    _
  $region43: #{tpu_custom_call.1} parent=0 // pred_check_branch
    %923 = sbr.rel (0) target = $region45
  $region44: #{tpu_custom_call.1} parent=0 // pred_region
    _
  $region45: #{tpu_custom_call.1} parent=0 // pred_fallthru
    _
  // Predicated region
  $region46: #{tpu_custom_call.1} parent=0 // pred_check
    _
  $region47: #{tpu_custom_call.1} parent=0 // pred_check_branch
    %925 = sbr.rel (0) target = $region49
  $region48: #{tpu_custom_call.1} parent=0 // pred_region
    _
  $region49: #{tpu_custom_call.1} parent=0 // pred_fallthru
    _

</llo_original>
